<compile_context>
chip_gen: v7x
topology: tpu7x:2x2x1
jax: 0.10.0
libtpu: 0.0.40
codegen_flags: <defaults>
</compile_context>

<pallas_src>
import math

import jax
import jax.numpy as jnp
from jax.experimental import pallas as pl
from jax.experimental.pallas import tpu as pltpu


def _drop_path_kernel(scale_ref, x_ref, o_ref):
    # scale_ref: (TB, 1) f32 with the per-sample value in {0, 1/keep_prob}.
    # x_ref / o_ref: (TB, TF) tile of the flattened (B, F) input.
    o_ref[...] = x_ref[...] * scale_ref[...].astype(x_ref.dtype)


def _choose_tiles(B, F, itemsize):
    # Batch tile: <= 8 so the second-to-last block dim is either == B or a
    # multiple of 8 (layout rule); packing several samples per step amortizes
    # the ~0.35 us per-grid-step overhead.
    tb = B if B <= 8 else 8
    # Feature tile: lane-dense (multiple of 128), ~2 MiB per input block.
    target_bytes = 2 * 1024 * 1024
    if F % 128 == 0:
        tf = max(128, (target_bytes // (tb * itemsize)) // 128 * 128)
        tf = min(F, tf)
    else:
        # Non-multiple-of-128 feature dims: fall back to the full dim (allowed
        # by BlockSpec rules). Real ViT dims (384/768/1024 * tokens) never hit
        # this branch.
        tf = F
    return tb, tf


def drop_path(x, drop_prob: float = 0.0, training: bool = False, *,
              key=None, seed: int = 0):
    """Pallas DropPath. Identity when not training / drop_prob == 0."""
    if drop_prob == 0.0 or not training:
        return x
    if key is None:
        key = jax.random.PRNGKey(seed)

    keep_prob = 1.0 - float(drop_prob)
    B = x.shape[0]
    F = int(math.prod(x.shape[1:])) if x.ndim > 1 else 1

    # One Bernoulli(keep_prob) draw per sample, exactly as the torch code:
    # floor(keep_prob + U[0,1)) in {0., 1.}, with the 1/keep_prob scale folded in.
    u = jax.random.uniform(key, (B, 1), dtype=jnp.float32)
    scale = jnp.floor(keep_prob + u) * (1.0 / keep_prob)

    x2 = x.reshape(B, F)
    tb, tf = _choose_tiles(B, F, x2.dtype.itemsize)
    grid = (pl.cdiv(B, tb), pl.cdiv(F, tf))

    out = pl.pallas_call(
        _drop_path_kernel,
        out_shape=jax.ShapeDtypeStruct((B, F), x.dtype),
        grid=grid,
        in_specs=[
            pl.BlockSpec((tb, 1), lambda i, j: (i, 0)),    # per-sample scale
            pl.BlockSpec((tb, tf), lambda i, j: (i, j)),   # x tile
        ],
        out_specs=pl.BlockSpec((tb, tf), lambda i, j: (i, j)),
        compiler_params=pltpu.CompilerParams(
            # Fully independent grid steps: lets Mosaic shard across both
            # TensorCores on v7x; measured-neutral on v5e/v6e.
            dimension_semantics=("parallel", "parallel")
        ),
    )(scale, x2)
    return out.reshape(x.shape)


class DropPath:
    """Mirror of the nn.Module: holds drop_prob, forwards via the Pallas kernel."""

    def __init__(self, drop_prob=None):
        self.drop_prob = 0.0 if drop_prob is None else float(drop_prob)
        self.training = True

    def __call__(self, x, key=None, seed: int = 0):
        return drop_path(x, self.drop_prob, self.training, key=key, seed=seed)


if __name__ == "__main__":
    key = jax.random.PRNGKey(0)
    B, N, D = 2, 8, 32
    x = jax.random.normal(key, (B, N, D), dtype=jnp.float32)

    module = DropPath(drop_prob=0.3)

    # Training mode: per-sample stochastic depth via the Pallas kernel.
    module.training = True
    y_train = module(x, key=jax.random.PRNGKey(123))
    jax.block_until_ready(y_train)

    # Sanity: every sample is either all-zero or exactly x / keep_prob.
    keep_prob = 1.0 - module.drop_prob
    for b in range(B):
        yb = y_train[b]
        is_dropped = bool(jnp.all(yb == 0.0))
        is_kept = bool(jnp.allclose(yb, x[b] / keep_prob, rtol=1e-5, atol=1e-5))
        assert is_dropped or is_kept, "per-sample drop-path invariant violated"

    # Eval mode: identity path.
    module.training = False
    y_eval = module(x)
    jax.block_until_ready(y_eval)
    assert bool(jnp.array_equal(y_eval, x))

    print("KERNEL_OK")
</pallas_src>

<mosaic_0001>
module attributes {stable_mosaic.version = 11 : i64} {
  func.func @_drop_path_kernel(%arg0: i32, %arg1: i32, %arg2: memref<2x1xf32, #tpu.memory_space<vmem>>, %arg3: memref<2x256xf32, #tpu.memory_space<vmem>>, %arg4: memref<2x256xf32, #tpu.memory_space<vmem>>) attributes {dimension_semantics = [#tpu.dimension_semantics<parallel>, #tpu.dimension_semantics<parallel>], iteration_bounds = array<i64: 1, 1>, scalar_prefetch = 0 : i64, scratch_operands = 0 : i64, tpu.core_type = #tpu.core_type<tc>, window_params = [{transform_indices = @transform_0, window_bounds = array<i64: 2, 1>}, {transform_indices = @transform_1, window_bounds = array<i64: 2, 256>}, {transform_indices = @transform_2, window_bounds = array<i64: 2, 256>}]} {
    %c0 = arith.constant 0 : index
    %c0_0 = arith.constant 0 : index
    %0 = vector.load %arg3[%c0, %c0_0] : memref<2x256xf32, #tpu.memory_space<vmem>>, vector<2x256xf32>
    %c0_1 = arith.constant 0 : index
    %c0_2 = arith.constant 0 : index
    %1 = vector.load %arg2[%c0_1, %c0_2] : memref<2x1xf32, #tpu.memory_space<vmem>>, vector<2x1xf32>
    %2 = vector.broadcast %1 : vector<2x1xf32> to vector<2x256xf32>
    %3 = arith.mulf %0, %2 : vector<2x256xf32>
    %c0_3 = arith.constant 0 : index
    %c0_4 = arith.constant 0 : index
    %4 = vector.load %arg4[%c0_3, %c0_4] : memref<2x256xf32, #tpu.memory_space<vmem>>, vector<2x256xf32>
    tpu.vector_store %arg4[%c0_3, %c0_4], %3 {strides = array<i32>} : memref<2x256xf32, #tpu.memory_space<vmem>>, vector<2x256xf32>,
    return
  }
  func.func @transform_0(%arg0: i32, %arg1: i32) -> (i32, i32) {
    %c0_i32 = arith.constant 0 : i32
    %c0_i32_0 = arith.constant 0 : i32
    return %arg0, %c0_i32 : i32, i32
  }
  func.func @transform_1(%arg0: i32, %arg1: i32) -> (i32, i32) {
    %c0_i32 = arith.constant 0 : i32
    return %arg0, %arg1 : i32, i32
  }
  func.func @transform_2(%arg0: i32, %arg1: i32) -> (i32, i32) {
    %c0_i32 = arith.constant 0 : i32
    return %arg0, %arg1 : i32, i32
  }
}

</mosaic_0001>

<llo_original>
// kernel: tpu_custom_call.1
$region0: #{tpu_custom_call.1}
  #allocation0 [shape = 'u32[]', space=smem, size = 0x4, offset = 0x4, fixed_abs, tag = 'smem constant byte address 0x4 - core index']
  #allocation1 [shape = 'u32[144,128]{1,0:T(1,128)}', space=vmem, size = 0x12000, scoped, tag = 'internal scratch']
  %s0 = inlined_call_operand.vmem [shape: f32[2,1], index: 0, kind: input, shape index: {}]
  %s1 = inlined_call_operand.vmem [shape: f32[2,256], index: 1, kind: input, shape index: {}]
  %s2 = inlined_call_operand.hbm [shape: f32[2,256], index: 2, kind: output, shape index: {}]
  %s3 = sld [smem:[#allocation0]]
  $region18: #{tpu_custom_call.1} parent=0
    _
  %s5 = ssub.s32 1, %s3
  %s6 = scalar_select 0, %s5, %s3
  $region1: #{tpu_custom_call.1} parent=0
    #allocation2 [shape = 'u8[2048]{0}', space=vmem, size = 0x800, scoped, tag = 'output window, operand 0, single buffered']
    #allocation3 [shape = 's32[1]{0}', space=sflag, size = 0x4, scoped, tag = 'scoped memory for tpu_custom_call.1']
    %7 = vsyncpa [#allocation3], 0
    // Predicated region
    $region2: #{tpu_custom_call.1} parent=1 // pred_check
      _
    $region3: #{tpu_custom_call.1} parent=1 // pred_check_branch
      %9 = sbr.rel (0) target = $region5
    $region4: #{tpu_custom_call.1} parent=1 // pred_region
      _
    $region5: #{tpu_custom_call.1} parent=1 // pred_fallthru
      _
    // Predicated region
    $region6: #{tpu_custom_call.1} parent=1 // pred_check
      _
    $region7: #{tpu_custom_call.1} parent=1 // pred_check_branch
      %11 = sbr.rel (0) target = $region9
    $region8: #{tpu_custom_call.1} parent=1 // pred_region
      _
    $region9: #{tpu_custom_call.1} parent=1 // pred_fallthru
      _
    %v12 = vld [vmem:[%s1] sm:$0xf]
    %v13 = vld [vmem:[%s0] sm:$0x3]
    %15 = vset.pattern.permute.xlu0 0
    %16 = vperm.xlu0 %15, %v13
    %v17 = vpop.permute.xlu0 %16
    %v19 = vunpack.c.l.s4 269488144
    %v20 = vunpack.c.0.s8 %v19
    %v21 = vlaneseq
    %v22 = vshrl.u32 %v21, 7
    %v23 = vsub.s32 %v20, %v22
    %v24 = vrot.slane %v17, %v23
    %v26 = vmul.f32 %v12, %v24
    %27 = vst [vmem:[#allocation2] sm:$0xf] %v26
    // Predicated region
    $region10: #{tpu_custom_call.1} parent=1 // pred_check
      _
    $region11: #{tpu_custom_call.1} parent=1 // pred_check_branch
      %29 = sbr.rel (0) target = $region13
    $region12: #{tpu_custom_call.1} parent=1 // pred_region
      %s31 = ssub.s32 64, 64
      %32 = vsyncadd [#allocation3], %s31
      %s34 = sshll.u32 [#allocation2], 4
      %s35 = int_to_ptr.vmem [resolvable:$true] %s34
      %37 = dma.vmem_to_hbm [thread:$0]  %s35, 64, %s2, [#allocation3]
    $region13: #{tpu_custom_call.1} parent=1 // pred_fallthru
      _
    // Predicated region
    $region14: #{tpu_custom_call.1} parent=1 // pred_check
      _
    $region15: #{tpu_custom_call.1} parent=1 // pred_check_branch
      %39 = sbr.rel (0) target = $region17
    $region16: #{tpu_custom_call.1} parent=1 // pred_region
      %40 = dma.done [#allocation3], 64
    $region17: #{tpu_custom_call.1} parent=1 // pred_fallthru
      _
    %41 = vsyncpa [#allocation3], 1

</llo_original>
